<compile_context>
chip_gen: v7x
topology: tpu7x:2x2x1
jax: 0.10.0
libtpu: 0.0.40
codegen_flags: <defaults>
</compile_context>

<pallas_src>
import jax
import jax.numpy as jnp
from jax.experimental import pallas as pl
from jax.experimental.pallas import tpu as pltpu


def _identity_copy_kernel(x_ref, o_ref):
    # Lane-dense (TILE_N, C) block: straight identity copy, no relayout.
    o_ref[...] = x_ref[...]


def _pick_tile_n(n: int, c: int, itemsize: int, target_bytes: int = 1 << 20) -> int:
    """Rows per block: multiple of 8, ~target_bytes per buffer, capped at N."""
    if n <= 8:
        return n  # single full-array block (always layout-legal)
    rows = target_bytes // max(c * itemsize, 1)
    rows = max(8, (rows // 8) * 8)
    return min(rows, n)


def unsqueeze_nc_to_nc11(x: jax.Array, tile_n: int | None = None) -> jax.Array:
    """Equivalent of PyTorch's x.view(N, C, 1, 1) for an (N, C) input."""
    n, c = x.shape

    if tile_n is None:
        tile_n = _pick_tile_n(n, c, x.dtype.itemsize)
    tile_n = max(1, min(tile_n, n))

    grid = (pl.cdiv(n, tile_n),)

    out2d = pl.pallas_call(
        _identity_copy_kernel,
        out_shape=jax.ShapeDtypeStruct((n, c), x.dtype),
        grid=grid,
        in_specs=[pl.BlockSpec((tile_n, c), lambda i: (i, 0))],
        out_specs=pl.BlockSpec((tile_n, c), lambda i: (i, 0)),
        compiler_params=pltpu.CompilerParams(
            dimension_semantics=("parallel",),
        ),
    )(x)

    # The actual "unsqueeze": a free, metadata-only reshape outside the kernel.
    return out2d.reshape(n, c, 1, 1)


if __name__ == "__main__":
    key = jax.random.PRNGKey(0)

    # Small shape matching the module's expectation (N, C).
    N, C = 2, 32
    x = jax.random.normal(key, (N, C), dtype=jnp.float32)

    ref = x.reshape(N, C, 1, 1)
    out = jax.block_until_ready(unsqueeze_nc_to_nc11(x))

    assert out.shape == (N, C, 1, 1), out.shape
    assert out.dtype == x.dtype, out.dtype
    assert jnp.array_equal(out, ref), "mismatch vs reference reshape (small case)"

    # Second case: exercises the tiled multi-block "parallel" grid path,
    # including a ragged final block (N2 not divisible by tile_n).
    N2, C2 = 200, 128
    x2 = jax.random.normal(jax.random.PRNGKey(1), (N2, C2), dtype=jnp.float32)
    ref2 = x2.reshape(N2, C2, 1, 1)
    out2 = jax.block_until_ready(unsqueeze_nc_to_nc11(x2, tile_n=64))

    assert out2.shape == (N2, C2, 1, 1), out2.shape
    assert jnp.array_equal(out2, ref2), "mismatch vs reference reshape (tiled case)"

    print("KERNEL_OK")
</pallas_src>

<mosaic_0001>
module attributes {stable_mosaic.version = 11 : i64} {
  func.func @_identity_copy_kernel(%arg0: i32, %arg1: memref<2x32xf32, #tpu.memory_space<vmem>>, %arg2: memref<2x32xf32, #tpu.memory_space<vmem>>) attributes {dimension_semantics = [#tpu.dimension_semantics<parallel>], iteration_bounds = array<i64: 1>, scalar_prefetch = 0 : i64, scratch_operands = 0 : i64, tpu.core_type = #tpu.core_type<tc>, window_params = [{transform_indices = @transform_0, window_bounds = array<i64: 2, 32>}, {transform_indices = @transform_1, window_bounds = array<i64: 2, 32>}]} {
    %c0 = arith.constant 0 : index
    %c0_0 = arith.constant 0 : index
    %0 = vector.load %arg1[%c0, %c0_0] : memref<2x32xf32, #tpu.memory_space<vmem>>, vector<2x32xf32>
    %c0_1 = arith.constant 0 : index
    %c0_2 = arith.constant 0 : index
    %1 = vector.load %arg2[%c0_1, %c0_2] : memref<2x32xf32, #tpu.memory_space<vmem>>, vector<2x32xf32>
    tpu.vector_store %arg2[%c0_1, %c0_2], %0 {strides = array<i32>} : memref<2x32xf32, #tpu.memory_space<vmem>>, vector<2x32xf32>,
    return
  }
  func.func @transform_0(%arg0: i32) -> (i32, i32) {
    %c0_i32 = arith.constant 0 : i32
    %c0_i32_0 = arith.constant 0 : i32
    return %arg0, %c0_i32 : i32, i32
  }
  func.func @transform_1(%arg0: i32) -> (i32, i32) {
    %c0_i32 = arith.constant 0 : i32
    %c0_i32_0 = arith.constant 0 : i32
    return %arg0, %c0_i32 : i32, i32
  }
}

</mosaic_0001>

<llo_original>
// kernel: tpu_custom_call.1
$region0: #{tpu_custom_call.1}
  #allocation0 [shape = 'u32[]', space=smem, size = 0x4, offset = 0x4, fixed_abs, tag = 'smem constant byte address 0x4 - core index']
  #allocation1 [shape = 'u32[144,128]{1,0:T(1,128)}', space=vmem, size = 0x12000, scoped, tag = 'internal scratch']
  %s0 = inlined_call_operand.hbm [shape: f32[2,32], index: 0, kind: input, shape index: {}]
  %s1 = inlined_call_operand.hbm [shape: f32[2,32], index: 1, kind: output, shape index: {}]
  %s2 = sld [smem:[#allocation0]]
  $region18: #{tpu_custom_call.1} parent=0
    _
  %s4 = ssub.s32 1, %s2
  %s5 = scalar_select 0, %s4, %s2
  $region1: #{tpu_custom_call.1} parent=0
    #allocation2 [shape = 'u8[1024]{0}', space=vmem, size = 0x400, scoped, tag = 'input window, operand 0, single buffered']
    #allocation3 [shape = 's32[1]{0}', space=sflag, size = 0x4, scoped, tag = 'scoped memory for tpu_custom_call.1']
    #allocation4 [shape = 's32[1]{0}', space=sflag, size = 0x4, scoped, tag = 'scoped memory for tpu_custom_call.1']
    #allocation5 [shape = 'u8[1024]{0}', space=vmem, size = 0x400, scoped, tag = 'output window, operand 0, single buffered']
    %6 = vsyncpa [#allocation3], 0
    %7 = vsyncpa [#allocation4], 0
    // Predicated region
    $region2: #{tpu_custom_call.1} parent=1 // pred_check
      _
    $region3: #{tpu_custom_call.1} parent=1 // pred_check_branch
      %9 = sbr.rel (0) target = $region5
    $region4: #{tpu_custom_call.1} parent=1 // pred_region
      %s11 = ssub.s32 32, 32
      %12 = vsyncadd [#allocation3], %s11
      %s14 = sshll.u32 [#allocation2], 4
      %s15 = int_to_ptr.vmem [resolvable:$true] %s14
      %17 = dma.hbm_to_vmem [thread:$0]  %s0, 32, %s15, [#allocation3]
    $region5: #{tpu_custom_call.1} parent=1 // pred_fallthru
      _
    // Predicated region
    $region6: #{tpu_custom_call.1} parent=1 // pred_check
      _
    $region7: #{tpu_custom_call.1} parent=1 // pred_check_branch
      %19 = sbr.rel (0) target = $region9
    $region8: #{tpu_custom_call.1} parent=1 // pred_region
      %20 = dma.done [#allocation3], 32
    $region9: #{tpu_custom_call.1} parent=1 // pred_fallthru
      _
    %v21 = vld [vmem:[#allocation2] sm:$0x3]
    %vm22 = vcmask 254976
    %23 = vst.msk [vmem:[#allocation5] sm:$0x3] %vm22, %v21
    // Predicated region
    $region10: #{tpu_custom_call.1} parent=1 // pred_check
      _
    $region11: #{tpu_custom_call.1} parent=1 // pred_check_branch
      %25 = sbr.rel (0) target = $region13
    $region12: #{tpu_custom_call.1} parent=1 // pred_region
      %s27 = ssub.s32 32, 32
      %28 = vsyncadd [#allocation4], %s27
      %s30 = sshll.u32 [#allocation5], 4
      %s31 = int_to_ptr.vmem [resolvable:$true] %s30
      %33 = dma.vmem_to_hbm [thread:$0]  %s31, 32, %s1, [#allocation4]
    $region13: #{tpu_custom_call.1} parent=1 // pred_fallthru
      _
    // Predicated region
    $region14: #{tpu_custom_call.1} parent=1 // pred_check
      _
    $region15: #{tpu_custom_call.1} parent=1 // pred_check_branch
      %35 = sbr.rel (0) target = $region17
    $region16: #{tpu_custom_call.1} parent=1 // pred_region
      %36 = dma.done [#allocation4], 32
    $region17: #{tpu_custom_call.1} parent=1 // pred_fallthru
      _
    %37 = vsyncpa [#allocation3], 1
    %38 = vsyncpa [#allocation4], 1

</llo_original>
